<compile_context>
chip_gen: v5e
topology: v5e:2x2
jax: 0.10.0
libtpu: 0.0.40
codegen_flags: <defaults>
</compile_context>

<pallas_src>
import jax
import jax.numpy as jnp
from jax import lax
from jax.experimental import pallas as pl
from jax.experimental.pallas import tpu as pltpu

# ----- hyper-parameters (BackBoneNet(ch=4, dropout=0.5), eval mode) -----
CH = 4            # electrode channels (height of the conv1_2 kernel)
T = 400           # time samples
B = 2
K1, PAD1, C1_OUT = 40, 6, 8
C12_OUT = 4
POOL1_K, POOL1_S = 10, 4
K2, PAD2, C2_OUT = 20, 4, 2
POOL2_K, POOL2_S = 20, 8
EPS = 1e-5

# ----- derived sizes -----
TP = T + 2 * PAD1                      # 412 : padded time for conv1
W1 = TP - K1 + 1                       # 373 : width after conv1 / conv1_2
L1 = (W1 - POOL1_K) // POOL1_S + 1     # 91  : width after pool1
W2 = L1 + 2 * PAD2 - K2 + 1            # 80  : width after conv2
L2 = (W2 - POOL2_K) // POOL2_S + 1     # 8   : width after pool2
W2P = L1 + 2 * PAD2                    # 99  : pool1 output incl. conv2 zero pad


# --------------------------------------------------------------------------
# Pallas kernel: full BackBone forward for one batch element (4 MXU matmuls)
# --------------------------------------------------------------------------
def backbone_kernel(cols1_ref, weff_ref, t1_ref, pm1p_ref, w3_ref, t2_ref,
                    pm2_ref, out_ref, cols2_ref):
    # fused conv1 + conv1_2 + BN1 (scale folded into weff): one single-pass
    # bf16 MXU matmul with f32 accumulation.
    z = jnp.dot(weff_ref[...], cols1_ref[...],
                preferred_element_type=jnp.float32) + t1_ref[...]        # (4, W1) f32
    z = jnp.where(z > 0, z, jnp.exp(jnp.minimum(z, 0.0)) - 1.0)          # ELU

    # AvgPool2d((1,10), stride (1,4)) as matmul; pm1p already contains conv2's
    # zero-padding columns, so p1p is conv2-ready with no scratch pad step.
    p1p = jnp.dot(z, pm1p_ref[...], preferred_element_type=jnp.float32)  # (4, W2P)

    # dropout -> identity (eval-mode semantics)
    # TODO(synk): training-mode F.dropout / batch-stat BatchNorm not reproduced.

    # conv2 (4->2, k=20, BN2 scale folded into w3): build the (K2*C12, W2)
    # im2col once in VMEM, then a single matmul (no 20 serialized micro-dots).
    for k in range(K2):
        cols2_ref[C12_OUT * k:C12_OUT * (k + 1), :] = p1p[:, k:k + W2]
    a2 = jnp.dot(w3_ref[...], cols2_ref[...],
                 preferred_element_type=jnp.float32) + t2_ref[...]       # (2, W2)
    a2 = jnp.where(a2 > 0, a2, jnp.exp(jnp.minimum(a2, 0.0)) - 1.0)      # ELU

    # AvgPool2d((1,20), stride (1,8)) as matmul
    out_ref[...] = jnp.dot(a2, pm2_ref[...],
                           preferred_element_type=jnp.float32)           # (2, L2)


# --------------------------------------------------------------------------
# Glue: parameter fusion / folding + pallas_call wrapper
# --------------------------------------------------------------------------
def pooling_matrix(in_len, out_len, k, s):
    t = jnp.arange(in_len)[:, None]
    j = jnp.arange(out_len)[None, :]
    return jnp.where((t >= s * j) & (t < s * j + k),
                     jnp.float32(1.0 / k), jnp.float32(0.0))


def backbone_forward_pallas(x, p):
    hi = lax.Precision.HIGHEST   # only for one-time glue weight fusion

    # --- glue: pad + im2col the input for the fused conv1/conv1_2 matmul ---
    xpad = jnp.pad(x, ((0, 0), (0, 0), (PAD1, PAD1)))                  # (B, CH, TP)
    cols1 = jnp.stack([xpad[:, :, k:k + W1] for k in range(K1)], axis=2)
    cols1 = cols1.reshape(B, CH * K1, W1)                              # (B, CH*K1, W1)
    cols1 = cols1.astype(jnp.bfloat16)                                 # halve HBM stream

    # --- glue: fuse conv1 into conv1_2, fold BN1 scale into the weight ---
    w1m = p['w1'][:, 0, 0, :]                                          # (8, K1)
    w2m = p['w2'][:, :, :, 0]                                          # (4, 8, CH)
    weff = jnp.einsum('oic,ik->ock', w2m, w1m, precision=hi)           # (4, CH, K1)
    weff = weff.reshape(C12_OUT, CH * K1)                              # c-major, k-minor
    beff = jnp.einsum('oic,i->o', w2m, p['b1'], precision=hi) + p['b2']

    s1 = p['g1'] / jnp.sqrt(p['v1'] + EPS)
    weff_s = (weff * s1[:, None]).astype(jnp.bfloat16)                 # BN1 scale folded
    t1 = (p['be1'] + s1 * (beff - p['m1']))[:, None]                   # (4, 1) f32

    # pool1 matrix with conv2's zero padding baked in as extra zero columns
    pm1p = jnp.pad(pooling_matrix(W1, L1, POOL1_K, POOL1_S),
                   ((0, 0), (PAD2, PAD2)))                             # (W1, W2P)

    # conv2 weight as (2, K2*C12), k-major / c-minor, BN2 scale folded in
    s2 = p['g2'] / jnp.sqrt(p['v2'] + EPS)
    w3_2d = jnp.transpose(p['w3'][:, :, 0, :], (0, 2, 1)).reshape(C2_OUT,
                                                                  K2 * C12_OUT)
    w3_s = w3_2d * s2[:, None]
    t2 = (p['be2'] - s2 * p['m2'])[:, None]                            # (2, 1)
    pm2 = pooling_matrix(W2, L2, POOL2_K, POOL2_S)                     # (W2, L2)

    const = lambda shape: pl.BlockSpec(shape, lambda b: (0, 0))

    out = pl.pallas_call(
        backbone_kernel,
        out_shape=jax.ShapeDtypeStruct((B, C2_OUT, L2), jnp.float32),
        grid=(B,),
        in_specs=[
            pl.BlockSpec((None, CH * K1, W1), lambda b: (b, 0, 0)),    # im2col'd input (bf16)
            const((C12_OUT, CH * K1)),                                 # fused conv weight (bf16)
            const((C12_OUT, 1)),                                       # BN1 shift (+bias)
            const((W1, W2P)),                                          # padded pool1 mat
            const((C2_OUT, K2 * C12_OUT)),                             # conv2 weight
            const((C2_OUT, 1)),                                        # BN2 shift
            const((W2, L2)),                                           # pool2 matrix
        ],
        out_specs=pl.BlockSpec((None, C2_OUT, L2), lambda b: (b, 0, 0)),
        scratch_shapes=[pltpu.VMEM((K2 * C12_OUT, W2), jnp.float32)],  # conv2 im2col
        compiler_params=pltpu.CompilerParams(dimension_semantics=("parallel",)),
    )(cols1, weff_s, t1, pm1p, w3_s, t2, pm2)

    return out.reshape(B, C2_OUT * L2)      # matches torch reshape(-1, 2*8)


# --------------------------------------------------------------------------
# Pure-JAX reference (same eval-mode semantics, f32 HIGHEST) for verification
# --------------------------------------------------------------------------
def backbone_forward_reference(x, p):
    hi = lax.Precision.HIGHEST
    dn = ('NCHW', 'OIHW', 'NCHW')
    y = x[:, None, :, :]
    y = lax.conv_general_dilated(y, p['w1'], (1, 1), [(0, 0), (PAD1, PAD1)],
                                 dimension_numbers=dn, precision=hi)
    y = y + p['b1'][None, :, None, None]
    y = lax.conv_general_dilated(y, p['w2'], (1, 1), 'VALID',
                                 dimension_numbers=dn, precision=hi)
    y = y + p['b2'][None, :, None, None]
    y = (y - p['m1'][None, :, None, None]) / jnp.sqrt(p['v1'][None, :, None, None] + EPS)
    y = y * p['g1'][None, :, None, None] + p['be1'][None, :, None, None]
    y = jnp.where(y > 0, y, jnp.exp(y) - 1.0)
    y = lax.reduce_window(y, 0.0, lax.add, (1, 1, 1, POOL1_K),
                          (1, 1, 1, POOL1_S), 'VALID') / POOL1_K
    y = lax.conv_general_dilated(y, p['w3'], (1, 1), [(0, 0), (PAD2, PAD2)],
                                 dimension_numbers=dn, precision=hi)
    y = (y - p['m2'][None, :, None, None]) / jnp.sqrt(p['v2'][None, :, None, None] + EPS)
    y = y * p['g2'][None, :, None, None] + p['be2'][None, :, None, None]
    y = jnp.where(y > 0, y, jnp.exp(y) - 1.0)
    y = lax.reduce_window(y, 0.0, lax.add, (1, 1, 1, POOL2_K),
                          (1, 1, 1, POOL2_S), 'VALID') / POOL2_K
    return y.reshape(-1, C2_OUT * L2)


# --------------------------------------------------------------------------
# Deterministic parameter init (shapes from BackBoneNet.__init__)
# --------------------------------------------------------------------------
def init_params(key):
    ks = jax.random.split(key, 7)
    p = {}
    p['w1'] = 0.2 * jax.random.normal(ks[0], (C1_OUT, 1, 1, K1), jnp.float32)
    p['b1'] = 0.1 * jax.random.normal(ks[1], (C1_OUT,), jnp.float32)
    p['w2'] = 0.2 * jax.random.normal(ks[2], (C12_OUT, C1_OUT, CH, 1), jnp.float32)
    p['b2'] = 0.1 * jax.random.normal(ks[3], (C12_OUT,), jnp.float32)
    p['w3'] = 0.2 * jax.random.normal(ks[4], (C2_OUT, C12_OUT, 1, K2), jnp.float32)
    p['g1'] = 1.0 + 0.1 * jax.random.normal(ks[5], (C12_OUT,), jnp.float32)
    p['be1'] = 0.1 * jax.random.normal(ks[6], (C12_OUT,), jnp.float32)
    p['m1'] = 0.05 * jnp.arange(C12_OUT, dtype=jnp.float32)
    p['v1'] = 1.0 + 0.1 * jnp.arange(C12_OUT, dtype=jnp.float32)
    p['g2'] = jnp.array([1.1, 0.9], jnp.float32)
    p['be2'] = jnp.array([0.05, -0.05], jnp.float32)
    p['m2'] = jnp.array([0.02, -0.03], jnp.float32)
    p['v2'] = jnp.array([1.05, 0.95], jnp.float32)
    return p


if __name__ == "__main__":
    key = jax.random.PRNGKey(0)
    kx, kp = jax.random.split(key)
    x = jax.random.normal(kx, (B, CH, T), jnp.float32)
    params = init_params(kp)

    out = jax.jit(backbone_forward_pallas)(x, params)
    out = jax.block_until_ready(out)
    assert out.shape == (B, C2_OUT * L2)

    ref = backbone_forward_reference(x, params)
    max_err = float(jnp.max(jnp.abs(out - ref)))
    # Stage-1 activations/weights are stored in bf16 and all kernel matmuls run
    # as single-pass bf16 MXU ops with f32 accumulation; the reference is pure
    # f32 at HIGHEST precision, hence the bf16-level tolerance below.
    assert max_err < 6e-2, f"mismatch vs reference: max_err={max_err}"

    print("KERNEL_OK")
</pallas_src>

<mosaic_0001>
module attributes {stable_mosaic.version = 11 : i64} {
  func.func @backbone_kernel(%arg0: i32, %arg1: memref<1x160x373xbf16, #tpu.memory_space<vmem>>, %arg2: memref<4x160xbf16, #tpu.memory_space<vmem>>, %arg3: memref<4x1xf32, #tpu.memory_space<vmem>>, %arg4: memref<373x99xf32, #tpu.memory_space<vmem>>, %arg5: memref<2x80xf32, #tpu.memory_space<vmem>>, %arg6: memref<2x1xf32, #tpu.memory_space<vmem>>, %arg7: memref<80x8xf32, #tpu.memory_space<vmem>>, %arg8: memref<1x2x8xf32, #tpu.memory_space<vmem>>, %arg9: memref<80x80xf32, #tpu.memory_space<vmem>>) attributes {dimension_semantics = [#tpu.dimension_semantics<parallel>], iteration_bounds = array<i64: 2>, scalar_prefetch = 0 : i64, scratch_operands = 1 : i64, tpu.core_type = #tpu.core_type<tc>, window_params = [{transform_indices = @transform_0, window_bounds = array<i64: 1, 160, 373>}, {pipeline_mode = #tpu.pipeline_mode<synchronous>, transform_indices = @transform_1, window_bounds = array<i64: 4, 160>}, {pipeline_mode = #tpu.pipeline_mode<synchronous>, transform_indices = @transform_2, window_bounds = array<i64: 4, 1>}, {pipeline_mode = #tpu.pipeline_mode<synchronous>, transform_indices = @transform_3, window_bounds = array<i64: 373, 99>}, {pipeline_mode = #tpu.pipeline_mode<synchronous>, transform_indices = @transform_4, window_bounds = array<i64: 2, 80>}, {pipeline_mode = #tpu.pipeline_mode<synchronous>, transform_indices = @transform_5, window_bounds = array<i64: 2, 1>}, {pipeline_mode = #tpu.pipeline_mode<synchronous>, transform_indices = @transform_6, window_bounds = array<i64: 80, 8>}, {transform_indices = @transform_7, window_bounds = array<i64: 1, 2, 8>}]} {
    %c0 = arith.constant 0 : index
    %c0_0 = arith.constant 0 : index
    %0 = vector.load %arg2[%c0, %c0_0] : memref<4x160xbf16, #tpu.memory_space<vmem>>, vector<4x160xbf16>
    %c0_1 = arith.constant 0 : index
    %c0_2 = arith.constant 0 : index
    %c0_3 = arith.constant 0 : index
    %1 = vector.load %arg1[%c0_1, %c0_2, %c0_3] : memref<1x160x373xbf16, #tpu.memory_space<vmem>>, vector<1x160x373xbf16>
    %2 = vector.shape_cast %1 : vector<1x160x373xbf16> to vector<160x373xbf16>
    %cst = arith.constant dense<0.000000e+00> : vector<4x373xf32>
    %3 = tpu.matmul %0, %2, %cst {dimension_numbers = #tpu.dot_dimension_numbers<[1], [0], [0], [1], [0, 0, 1, 1], [], []>} : vector<4x160xbf16>, vector<160x373xbf16>, vector<4x373xf32> -> vector<4x373xf32>
    %c0_4 = arith.constant 0 : index
    %c0_5 = arith.constant 0 : index
    %4 = vector.load %arg3[%c0_4, %c0_5] : memref<4x1xf32, #tpu.memory_space<vmem>>, vector<4x1xf32>
    %5 = vector.broadcast %4 : vector<4x1xf32> to vector<4x373xf32>
    %6 = arith.addf %3, %5 : vector<4x373xf32>
    %cst_6 = arith.constant 0.000000e+00 : f32
    %7 = vector.broadcast %cst_6 : f32 to vector<4x373xf32>
    %8 = arith.cmpf ogt, %6, %7 : vector<4x373xf32>
    %cst_7 = arith.constant 0.000000e+00 : f32
    %9 = vector.broadcast %cst_7 : f32 to vector<4x373xf32>
    %10 = arith.minimumf %6, %9 : vector<4x373xf32>
    %11 = math.exp %10 : vector<4x373xf32>
    %cst_8 = arith.constant 1.000000e+00 : f32
    %12 = vector.broadcast %cst_8 : f32 to vector<4x373xf32>
    %13 = arith.subf %11, %12 : vector<4x373xf32>
    %14 = arith.select %8, %6, %13 : vector<4x373xi1>, vector<4x373xf32>
    %c0_9 = arith.constant 0 : index
    %c0_10 = arith.constant 0 : index
    %15 = vector.load %arg4[%c0_9, %c0_10] : memref<373x99xf32, #tpu.memory_space<vmem>>, vector<373x99xf32>
    %cst_11 = arith.constant dense<0.000000e+00> : vector<4x99xf32>
    %16 = tpu.matmul %14, %15, %cst_11 {dimension_numbers = #tpu.dot_dimension_numbers<[1], [0], [0], [1], [0, 0, 1, 1], [], []>} : vector<4x373xf32>, vector<373x99xf32>, vector<4x99xf32> -> vector<4x99xf32>
    %17 = vector.extract_strided_slice %16 {offsets = [0, 0], sizes = [4, 80], strides = [1, 1]} : vector<4x99xf32> to vector<4x80xf32>
    %c0_12 = arith.constant 0 : index
    %c0_13 = arith.constant 0 : index
    %18 = vector.load %arg9[%c0_12, %c0_13] : memref<80x80xf32, #tpu.memory_space<vmem>>, vector<4x80xf32>
    tpu.vector_store %arg9[%c0_12, %c0_13], %17 {strides = array<i32>} : memref<80x80xf32, #tpu.memory_space<vmem>>, vector<4x80xf32>,
    %19 = vector.extract_strided_slice %16 {offsets = [0, 1], sizes = [4, 80], strides = [1, 1]} : vector<4x99xf32> to vector<4x80xf32>
    %c4 = arith.constant 4 : index
    %c0_14 = arith.constant 0 : index
    %20 = vector.load %arg9[%c4, %c0_14] : memref<80x80xf32, #tpu.memory_space<vmem>>, vector<4x80xf32>
    tpu.vector_store %arg9[%c4, %c0_14], %19 {strides = array<i32>} : memref<80x80xf32, #tpu.memory_space<vmem>>, vector<4x80xf32>,
    %21 = vector.extract_strided_slice %16 {offsets = [0, 2], sizes = [4, 80], strides = [1, 1]} : vector<4x99xf32> to vector<4x80xf32>
    %c8 = arith.constant 8 : index
    %c0_15 = arith.constant 0 : index
    %22 = vector.load %arg9[%c8, %c0_15] : memref<80x80xf32, #tpu.memory_space<vmem>>, vector<4x80xf32>
    tpu.vector_store %arg9[%c8, %c0_15], %21 {strides = array<i32>} : memref<80x80xf32, #tpu.memory_space<vmem>>, vector<4x80xf32>,
    %23 = vector.extract_strided_slice %16 {offsets = [0, 3], sizes = [4, 80], strides = [1, 1]} : vector<4x99xf32> to vector<4x80xf32>
    %c12 = arith.constant 12 : index
    %c0_16 = arith.constant 0 : index
    %24 = vector.load %arg9[%c12, %c0_16] : memref<80x80xf32, #tpu.memory_space<vmem>>, vector<4x80xf32>
    tpu.vector_store %arg9[%c12, %c0_16], %23 {strides = array<i32>} : memref<80x80xf32, #tpu.memory_space<vmem>>, vector<4x80xf32>,
    %25 = vector.extract_strided_slice %16 {offsets = [0, 4], sizes = [4, 80], strides = [1, 1]} : vector<4x99xf32> to vector<4x80xf32>
    %c16 = arith.constant 16 : index
    %c0_17 = arith.constant 0 : index
    %26 = vector.load %arg9[%c16, %c0_17] : memref<80x80xf32, #tpu.memory_space<vmem>>, vector<4x80xf32>
    tpu.vector_store %arg9[%c16, %c0_17], %25 {strides = array<i32>} : memref<80x80xf32, #tpu.memory_space<vmem>>, vector<4x80xf32>,
    %27 = vector.extract_strided_slice %16 {offsets = [0, 5], sizes = [4, 80], strides = [1, 1]} : vector<4x99xf32> to vector<4x80xf32>
    %c20 = arith.constant 20 : index
    %c0_18 = arith.constant 0 : index
    %28 = vector.load %arg9[%c20, %c0_18] : memref<80x80xf32, #tpu.memory_space<vmem>>, vector<4x80xf32>
    tpu.vector_store %arg9[%c20, %c0_18], %27 {strides = array<i32>} : memref<80x80xf32, #tpu.memory_space<vmem>>, vector<4x80xf32>,
    %29 = vector.extract_strided_slice %16 {offsets = [0, 6], sizes = [4, 80], strides = [1, 1]} : vector<4x99xf32> to vector<4x80xf32>
    %c24 = arith.constant 24 : index
    %c0_19 = arith.constant 0 : index
    %30 = vector.load %arg9[%c24, %c0_19] : memref<80x80xf32, #tpu.memory_space<vmem>>, vector<4x80xf32>
    tpu.vector_store %arg9[%c24, %c0_19], %29 {strides = array<i32>} : memref<80x80xf32, #tpu.memory_space<vmem>>, vector<4x80xf32>,
    %31 = vector.extract_strided_slice %16 {offsets = [0, 7], sizes = [4, 80], strides = [1, 1]} : vector<4x99xf32> to vector<4x80xf32>
    %c28 = arith.constant 28 : index
    %c0_20 = arith.constant 0 : index
    %32 = vector.load %arg9[%c28, %c0_20] : memref<80x80xf32, #tpu.memory_space<vmem>>, vector<4x80xf32>
    tpu.vector_store %arg9[%c28, %c0_20], %31 {strides = array<i32>} : memref<80x80xf32, #tpu.memory_space<vmem>>, vector<4x80xf32>,
    %33 = vector.extract_strided_slice %16 {offsets = [0, 8], sizes = [4, 80], strides = [1, 1]} : vector<4x99xf32> to vector<4x80xf32>
    %c32 = arith.constant 32 : index
    %c0_21 = arith.constant 0 : index
    %34 = vector.load %arg9[%c32, %c0_21] : memref<80x80xf32, #tpu.memory_space<vmem>>, vector<4x80xf32>
    tpu.vector_store %arg9[%c32, %c0_21], %33 {strides = array<i32>} : memref<80x80xf32, #tpu.memory_space<vmem>>, vector<4x80xf32>,
    %35 = vector.extract_strided_slice %16 {offsets = [0, 9], sizes = [4, 80], strides = [1, 1]} : vector<4x99xf32> to vector<4x80xf32>
    %c36 = arith.constant 36 : index
    %c0_22 = arith.constant 0 : index
    %36 = vector.load %arg9[%c36, %c0_22] : memref<80x80xf32, #tpu.memory_space<vmem>>, vector<4x80xf32>
    tpu.vector_store %arg9[%c36, %c0_22], %35 {strides = array<i32>} : memref<80x80xf32, #tpu.memory_space<vmem>>, vector<4x80xf32>,
    %37 = vector.extract_strided_slice %16 {offsets = [0, 10], sizes = [4, 80], strides = [1, 1]} : vector<4x99xf32> to vector<4x80xf32>
    %c40 = arith.constant 40 : index
    %c0_23 = arith.constant 0 : index
    %38 = vector.load %arg9[%c40, %c0_23] : memref<80x80xf32, #tpu.memory_space<vmem>>, vector<4x80xf32>
    tpu.vector_store %arg9[%c40, %c0_23], %37 {strides = array<i32>} : memref<80x80xf32, #tpu.memory_space<vmem>>, vector<4x80xf32>,
    %39 = vector.extract_strided_slice %16 {offsets = [0, 11], sizes = [4, 80], strides = [1, 1]} : vector<4x99xf32> to vector<4x80xf32>
    %c44 = arith.constant 44 : index
    %c0_24 = arith.constant 0 : index
    %40 = vector.load %arg9[%c44, %c0_24] : memref<80x80xf32, #tpu.memory_space<vmem>>, vector<4x80xf32>
    tpu.vector_store %arg9[%c44, %c0_24], %39 {strides = array<i32>} : memref<80x80xf32, #tpu.memory_space<vmem>>, vector<4x80xf32>,
    %41 = vector.extract_strided_slice %16 {offsets = [0, 12], sizes = [4, 80], strides = [1, 1]} : vector<4x99xf32> to vector<4x80xf32>
    %c48 = arith.constant 48 : index
    %c0_25 = arith.constant 0 : index
    %42 = vector.load %arg9[%c48, %c0_25] : memref<80x80xf32, #tpu.memory_space<vmem>>, vector<4x80xf32>
    tpu.vector_store %arg9[%c48, %c0_25], %41 {strides = array<i32>} : memref<80x80xf32, #tpu.memory_space<vmem>>, vector<4x80xf32>,
    %43 = vector.extract_strided_slice %16 {offsets = [0, 13], sizes = [4, 80], strides = [1, 1]} : vector<4x99xf32> to vector<4x80xf32>
    %c52 = arith.constant 52 : index
    %c0_26 = arith.constant 0 : index
    %44 = vector.load %arg9[%c52, %c0_26] : memref<80x80xf32, #tpu.memory_space<vmem>>, vector<4x80xf32>
    tpu.vector_store %arg9[%c52, %c0_26], %43 {strides = array<i32>} : memref<80x80xf32, #tpu.memory_space<vmem>>, vector<4x80xf32>,
    %45 = vector.extract_strided_slice %16 {offsets = [0, 14], sizes = [4, 80], strides = [1, 1]} : vector<4x99xf32> to vector<4x80xf32>
    %c56 = arith.constant 56 : index
    %c0_27 = arith.constant 0 : index
    %46 = vector.load %arg9[%c56, %c0_27] : memref<80x80xf32, #tpu.memory_space<vmem>>, vector<4x80xf32>
    tpu.vector_store %arg9[%c56, %c0_27], %45 {strides = array<i32>} : memref<80x80xf32, #tpu.memory_space<vmem>>, vector<4x80xf32>,
    %47 = vector.extract_strided_slice %16 {offsets = [0, 15], sizes = [4, 80], strides = [1, 1]} : vector<4x99xf32> to vector<4x80xf32>
    %c60 = arith.constant 60 : index
    %c0_28 = arith.constant 0 : index
    %48 = vector.load %arg9[%c60, %c0_28] : memref<80x80xf32, #tpu.memory_space<vmem>>, vector<4x80xf32>
    tpu.vector_store %arg9[%c60, %c0_28], %47 {strides = array<i32>} : memref<80x80xf32, #tpu.memory_space<vmem>>, vector<4x80xf32>,
    %49 = vector.extract_strided_slice %16 {offsets = [0, 16], sizes = [4, 80], strides = [1, 1]} : vector<4x99xf32> to vector<4x80xf32>
    %c64 = arith.constant 64 : index
    %c0_29 = arith.constant 0 : index
    %50 = vector.load %arg9[%c64, %c0_29] : memref<80x80xf32, #tpu.memory_space<vmem>>, vector<4x80xf32>
    tpu.vector_store %arg9[%c64, %c0_29], %49 {strides = array<i32>} : memref<80x80xf32, #tpu.memory_space<vmem>>, vector<4x80xf32>,
    %51 = vector.extract_strided_slice %16 {offsets = [0, 17], sizes = [4, 80], strides = [1, 1]} : vector<4x99xf32> to vector<4x80xf32>
    %c68 = arith.constant 68 : index
    %c0_30 = arith.constant 0 : index
    %52 = vector.load %arg9[%c68, %c0_30] : memref<80x80xf32, #tpu.memory_space<vmem>>, vector<4x80xf32>
    tpu.vector_store %arg9[%c68, %c0_30], %51 {strides = array<i32>} : memref<80x80xf32, #tpu.memory_space<vmem>>, vector<4x80xf32>,
    %53 = vector.extract_strided_slice %16 {offsets = [0, 18], sizes = [4, 80], strides = [1, 1]} : vector<4x99xf32> to vector<4x80xf32>
    %c72 = arith.constant 72 : index
    %c0_31 = arith.constant 0 : index
    %54 = vector.load %arg9[%c72, %c0_31] : memref<80x80xf32, #tpu.memory_space<vmem>>, vector<4x80xf32>
    tpu.vector_store %arg9[%c72, %c0_31], %53 {strides = array<i32>} : memref<80x80xf32, #tpu.memory_space<vmem>>, vector<4x80xf32>,
    %55 = vector.extract_strided_slice %16 {offsets = [0, 19], sizes = [4, 80], strides = [1, 1]} : vector<4x99xf32> to vector<4x80xf32>
    %c76 = arith.constant 76 : index
    %c0_32 = arith.constant 0 : index
    %56 = vector.load %arg9[%c76, %c0_32] : memref<80x80xf32, #tpu.memory_space<vmem>>, vector<4x80xf32>
    tpu.vector_store %arg9[%c76, %c0_32], %55 {strides = array<i32>} : memref<80x80xf32, #tpu.memory_space<vmem>>, vector<4x80xf32>,
    %c0_33 = arith.constant 0 : index
    %c0_34 = arith.constant 0 : index
    %57 = vector.load %arg5[%c0_33, %c0_34] : memref<2x80xf32, #tpu.memory_space<vmem>>, vector<2x80xf32>
    %c0_35 = arith.constant 0 : index
    %c0_36 = arith.constant 0 : index
    %58 = vector.load %arg9[%c0_35, %c0_36] : memref<80x80xf32, #tpu.memory_space<vmem>>, vector<80x80xf32>
    %cst_37 = arith.constant dense<0.000000e+00> : vector<2x80xf32>
    %59 = tpu.matmul %57, %58, %cst_37 {dimension_numbers = #tpu.dot_dimension_numbers<[1], [0], [0], [1], [0, 0, 1, 1], [], []>} : vector<2x80xf32>, vector<80x80xf32>, vector<2x80xf32> -> vector<2x80xf32>
    %c0_38 = arith.constant 0 : index
    %c0_39 = arith.constant 0 : index
    %60 = vector.load %arg6[%c0_38, %c0_39] : memref<2x1xf32, #tpu.memory_space<vmem>>, vector<2x1xf32>
    %61 = vector.broadcast %60 : vector<2x1xf32> to vector<2x80xf32>
    %62 = arith.addf %59, %61 : vector<2x80xf32>
    %cst_40 = arith.constant 0.000000e+00 : f32
    %63 = vector.broadcast %cst_40 : f32 to vector<2x80xf32>
    %64 = arith.cmpf ogt, %62, %63 : vector<2x80xf32>
    %cst_41 = arith.constant 0.000000e+00 : f32
    %65 = vector.broadcast %cst_41 : f32 to vector<2x80xf32>
    %66 = arith.minimumf %62, %65 : vector<2x80xf32>
    %67 = math.exp %66 : vector<2x80xf32>
    %cst_42 = arith.constant 1.000000e+00 : f32
    %68 = vector.broadcast %cst_42 : f32 to vector<2x80xf32>
    %69 = arith.subf %67, %68 : vector<2x80xf32>
    %70 = arith.select %64, %62, %69 : vector<2x80xi1>, vector<2x80xf32>
    %c0_43 = arith.constant 0 : index
    %c0_44 = arith.constant 0 : index
    %71 = vector.load %arg7[%c0_43, %c0_44] : memref<80x8xf32, #tpu.memory_space<vmem>>, vector<80x8xf32>
    %cst_45 = arith.constant dense<0.000000e+00> : vector<2x8xf32>
    %72 = tpu.matmul %70, %71, %cst_45 {dimension_numbers = #tpu.dot_dimension_numbers<[1], [0], [0], [1], [0, 0, 1, 1], [], []>} : vector<2x80xf32>, vector<80x8xf32>, vector<2x8xf32> -> vector<2x8xf32>
    %c0_46 = arith.constant 0 : index
    %c0_47 = arith.constant 0 : index
    %c0_48 = arith.constant 0 : index
    %73 = vector.load %arg8[%c0_46, %c0_47, %c0_48] : memref<1x2x8xf32, #tpu.memory_space<vmem>>, vector<1x2x8xf32>
    %74 = vector.shape_cast %73 : vector<1x2x8xf32> to vector<2x8xf32>
    %75 = vector.shape_cast %72 : vector<2x8xf32> to vector<1x2x8xf32>
    tpu.vector_store %arg8[%c0_46, %c0_47, %c0_48], %75 {strides = array<i32>} : memref<1x2x8xf32, #tpu.memory_space<vmem>>, vector<1x2x8xf32>,
    return
  }
  func.func @transform_0(%arg0: i32) -> (i32, i32, i32) {
    %c0_i32 = arith.constant 0 : i32
    %c0_i32_0 = arith.constant 0 : i32
    %c0_i32_1 = arith.constant 0 : i32
    return %arg0, %c0_i32, %c0_i32_0 : i32, i32, i32
  }
  func.func @transform_1(%arg0: i32) -> (i32, i32) {
    %c0_i32 = arith.constant 0 : i32
    %c0_i32_0 = arith.constant 0 : i32
    %c0_i32_1 = arith.constant 0 : i32
    return %c0_i32, %c0_i32_0 : i32, i32
  }
  func.func @transform_2(%arg0: i32) -> (i32, i32) {
    %c0_i32 = arith.constant 0 : i32
    %c0_i32_0 = arith.constant 0 : i32
    %c0_i32_1 = arith.constant 0 : i32
    return %c0_i32, %c0_i32_0 : i32, i32
  }
  func.func @transform_3(%arg0: i32) -> (i32, i32) {
    %c0_i32 = arith.constant 0 : i32
    %c0_i32_0 = arith.constant 0 : i32
    %c0_i32_1 = arith.constant 0 : i32
    return %c0_i32, %c0_i32_0 : i32, i32
  }
  func.func @transform_4(%arg0: i32) -> (i32, i32) {
    %c0_i32 = arith.constant 0 : i32
    %c0_i32_0 = arith.constant 0 : i32
    %c0_i32_1 = arith.constant 0 : i32
    return %c0_i32, %c0_i32_0 : i32, i32
  }
  func.func @transform_5(%arg0: i32) -> (i32, i32) {
    %c0_i32 = arith.constant 0 : i32
    %c0_i32_0 = arith.constant 0 : i32
    %c0_i32_1 = arith.constant 0 : i32
    return %c0_i32, %c0_i32_0 : i32, i32
  }
  func.func @transform_6(%arg0: i32) -> (i32, i32) {
    %c0_i32 = arith.constant 0 : i32
    %c0_i32_0 = arith.constant 0 : i32
    %c0_i32_1 = arith.constant 0 : i32
    return %c0_i32, %c0_i32_0 : i32, i32
  }
  func.func @transform_7(%arg0: i32) -> (i32, i32, i32) {
    %c0_i32 = arith.constant 0 : i32
    %c0_i32_0 = arith.constant 0 : i32
    %c0_i32_1 = arith.constant 0 : i32
    return %arg0, %c0_i32, %c0_i32_0 : i32, i32, i32
  }
}

</mosaic_0001>

<llo_original>
// kernel: backbone_forward_pallas.1
$region0: #{backbone_forward_pallas.1}
  #allocation0 [shape = 'u32[]', space=smem, size = 0x4, offset = 0x4, fixed_abs, tag = 'smem constant byte address 0x4 - core index']
  #allocation1 [shape = 'u32[72,128]{1,0:T(1,128)}', space=vmem, size = 0x9000, scoped, tag = 'internal scratch']
  #allocation2 [shape = 'f32[80,80]{1,0:T(8,128)}', space=vmem, size = 0xa000, scoped, tag = 'scratch operand']
  %s0 = inlined_call_operand.vmem [shape: bf16[2,160,373], index: 0, kind: input, shape index: {}]
  %s1 = inlined_call_operand.vmem [shape: bf16[4,160], index: 1, kind: input, shape index: {}]
  %s2 = inlined_call_operand.vmem [shape: f32[4,1], index: 2, kind: input, shape index: {}]
  %s3 = inlined_call_operand.vmem [shape: f32[373,99], index: 3, kind: input, shape index: {}]
  %s4 = inlined_call_operand.vmem [shape: f32[2,80], index: 4, kind: input, shape index: {}]
  %s5 = inlined_call_operand.vmem [shape: f32[2,1], index: 5, kind: input, shape index: {}]
  %s6 = inlined_call_operand.vmem [shape: f32[80,8], index: 6, kind: input, shape index: {}]
  %s7 = inlined_call_operand.vmem [shape: f32[2,2,8], index: 7, kind: output, shape index: {}]
  %s8 = sld [smem:[#allocation0]]
  $region61: #{backbone_forward_pallas.1} parent=0
    _
  %s10 = ssub.s32 1, %s8
  %s11 = scalar_select 0, %s10, %s8
  loop: start=0, step=1, limit=4
  $region2: #{backbone_forward_pallas.1} parent=0 // loop_pre_header
    _
  $region3: #{backbone_forward_pallas.1} parent=0 // loop_header
    %s13 = sphi 0, %s17
    %p14 = scmp.ge.s32.totalorder %s13, 4
    %s23 = sphi 0, %s25
    %s26 = sphi 0, %s23
    %s27 = sphi 0, %s26
    %s43 = sphi 0, %s27
    %s47 = sphi 0, %s47
    %s49 = sphi 0, %s47
    %s50 = sphi 0, %s49
    %s64 = sphi 0, %s50
    %s68 = sphi 0, %s68
    %s70 = sphi 0, %s68
    %s71 = sphi 0, %s70
    %s85 = sphi 0, %s71
    %s89 = sphi 0, %s89
    %s91 = sphi 0, %s89
    %s92 = sphi 0, %s91
    %s106 = sphi 0, %s92
    %s110 = sphi 0, %s110
    %s112 = sphi 0, %s110
    %s113 = sphi 0, %s112
    %s127 = sphi 0, %s113
    %s131 = sphi 0, %s131
    %s133 = sphi 0, %s131
    %s134 = sphi 0, %s133
    %s148 = sphi 0, %s134
    %s152 = sphi 0, %s152
    %s154 = sphi 0, %s152
    %s155 = sphi 0, %s154
    %s169 = sphi 0, %s155
    %s175 = sphi 0, %s177
    %s178 = sphi 0, %s175
    %s179 = sphi 0, %s178
    %s195 = sphi 0, %s179
  $region4: #{backbone_forward_pallas.1} parent=0 // loop_header_branch
    %16 = sbr.rel (%p14) target = $region8
  $region5: #{backbone_forward_pallas.1} parent=0 // loop_body
    %s18 = ssub.s32 %s13, 1
    %s19 = ssub.s32 %s13, 2
    %s20 = sadd.s32 %s13, 1
    %s21 = ssub.s32 %s13, %s20
    %p22 = scmp.eq.s32.totalorder %s21, 0
    %s24 = sadd.s32 %s23, 1
    %s25 = scalar_select %p22, %s23, %s24
    %p28 = pneg %p22
    %p29 = scmp.eq.s32.totalorder %s13, 1
    %p30 = por %p28, %p29
    %p31 = scmp.ne.s32.totalorder %s23, %s26
    %p32 = scmp.eq.s32.totalorder %s13, 0
    %p33 = por %p31, %p32
    %p34 = scmp.ne.s32.totalorder %s23, %s26
    %p35 = scmp.eq.s32.totalorder %s18, 1
    %p36 = por %p34, %p35
    %p37 = scmp.ne.s32.totalorder %s26, %s27
    %p38 = scmp.eq.s32.totalorder %s18, 0
    %p39 = por %p37, %p38
    %p40 = scmp.ne.s32.totalorder %s26, %s27
    %p41 = scmp.eq.s32.totalorder %s19, 1
    %p42 = por %p40, %p41
    %p44 = scmp.ne.s32.totalorder %s27, %s43
    %p45 = scmp.eq.s32.totalorder %s19, 0
    %p46 = por %p44, %p45
    %s48 = sadd.s32 %s47, 1
    %p51 = scmp.eq.s32.totalorder %s13, 1
    %p52 = scmp.ne.s32.totalorder %s47, %s49
    %p53 = scmp.eq.s32.totalorder %s13, 0
    %p54 = por %p52, %p53
    %p55 = scmp.ne.s32.totalorder %s47, %s49
    %p56 = scmp.eq.s32.totalorder %s18, 1
    %p57 = por %p55, %p56
    %p58 = scmp.ne.s32.totalorder %s49, %s50
    %p59 = scmp.eq.s32.totalorder %s18, 0
    %p60 = por %p58, %p59
    %p61 = scmp.ne.s32.totalorder %s49, %s50
    %p62 = scmp.eq.s32.totalorder %s19, 1
    %p63 = por %p61, %p62
    %p65 = scmp.ne.s32.totalorder %s50, %s64
    %p66 = scmp.eq.s32.totalorder %s19, 0
    %p67 = por %p65, %p66
    %s69 = sadd.s32 %s68, 1
    %p72 = scmp.eq.s32.totalorder %s13, 1
    %p73 = scmp.ne.s32.totalorder %s68, %s70
    %p74 = scmp.eq.s32.totalorder %s13, 0
    %p75 = por %p73, %p74
    %p76 = scmp.ne.s32.totalorder %s68, %s70
    %p77 = scmp.eq.s32.totalorder %s18, 1
    %p78 = por %p76, %p77
    %p79 = scmp.ne.s32.totalorder %s70, %s71
    %p80 = scmp.eq.s32.totalorder %s18, 0
    %p81 = por %p79, %p80
    %p82 = scmp.ne.s32.totalorder %s70, %s71
    %p83 = scmp.eq.s32.totalorder %s19, 1
    %p84 = por %p82, %p83
    %p86 = scmp.ne.s32.totalorder %s71, %s85
    %p87 = scmp.eq.s32.totalorder %s19, 0
    %p88 = por %p86, %p87
    %s90 = sadd.s32 %s89, 1
    %p93 = scmp.eq.s32.totalorder %s13, 1
    %p94 = scmp.ne.s32.totalorder %s89, %s91
    %p95 = scmp.eq.s32.totalorder %s13, 0
    %p96 = por %p94, %p95
    %p97 = scmp.ne.s32.totalorder %s89, %s91
    %p98 = scmp.eq.s32.totalorder %s18, 1
    %p99 = por %p97, %p98
    %p100 = scmp.ne.s32.totalorder %s91, %s92
    %p101 = scmp.eq.s32.totalorder %s18, 0
    %p102 = por %p100, %p101
    %p103 = scmp.ne.s32.totalorder %s91, %s92
    %p104 = scmp.eq.s32.totalorder %s19, 1
    %p105 = por %p103, %p104
    %p107 = scmp.ne.s32.totalorder %s92, %s106
    %p108 = scmp.eq.s32.totalorder %s19, 0
    %p109 = por %p107, %p108
    %s111 = sadd.s32 %s110, 1
    %p114 = scmp.eq.s32.totalorder %s13, 1
    %p115 = scmp.ne.s32.totalorder %s110, %s112
    %p116 = scmp.eq.s32.totalorder %s13, 0
    %p117 = por %p115, %p116
    %p118 = scmp.ne.s32.totalorder %s110, %s112
    %p119 = scmp.eq.s32.totalorder %s18, 1
    %p120 = por %p118, %p119
    %p121 = scmp.ne.s32.totalorder %s112, %s113
    %p122 = scmp.eq.s32.totalorder %s18, 0
    %p123 = por %p121, %p122
    %p124 = scmp.ne.s32.totalorder %s112, %s113
    %p125 = scmp.eq.s32.totalorder %s19, 1
    %p126 = por %p124, %p125
    %p128 = scmp.ne.s32.totalorder %s113, %s127
    %p129 = scmp.eq.s32.totalorder %s19, 0
    %p130 = por %p128, %p129
    %s132 = sadd.s32 %s131, 1
    %p135 = scmp.eq.s32.totalorder %s13, 1
    %p136 = scmp.ne.s32.totalorder %s131, %s133
    %p137 = scmp.eq.s32.totalorder %s13, 0
    %p138 = por %p136, %p137
    %p139 = scmp.ne.s32.totalorder %s131, %s133
    %p140 = scmp.eq.s32.totalorder %s18, 1
    %p141 = por %p139, %p140
    %p142 = scmp.ne.s32.totalorder %s133, %s134
    %p143 = scmp.eq.s32.totalorder %s18, 0
    %p144 = por %p142, %p143
    %p145 = scmp.ne.s32.totalorder %s133, %s134
    %p146 = scmp.eq.s32.totalorder %s19, 1
    %p147 = por %p145, %p146
    %p149 = scmp.ne.s32.totalorder %s134, %s148
    %p150 = scmp.eq.s32.totalorder %s19, 0
    %p151 = por %p149, %p150
    %s153 = sadd.s32 %s152, 1
    %p156 = scmp.eq.s32.totalorder %s13, 1
    %p157 = scmp.ne.s32.totalorder %s152, %s154
    %p158 = scmp.eq.s32.totalorder %s13, 0
    %p159 = por %p157, %p158
    %p160 = scmp.ne.s32.totalorder %s152, %s154
    %p161 = scmp.eq.s32.totalorder %s18, 1
    %p162 = por %p160, %p161
    %p163 = scmp.ne.s32.totalorder %s154, %s155
    %p164 = scmp.eq.s32.totalorder %s18, 0
    %p165 = por %p163, %p164
    %p166 = scmp.ne.s32.totalorder %s154, %s155
    %p167 = scmp.eq.s32.totalorder %s19, 1
    %p168 = por %p166, %p167
    %p170 = scmp.ne.s32.totalorder %s155, %s169
    %p171 = scmp.eq.s32.totalorder %s19, 0
    %p172 = por %p170, %p171
    %s173 = ssub.s32 %s13, %s20
    %p174 = scmp.eq.s32.totalorder %s173, 0
    %s176 = sadd.s32 %s175, 1
    %s177 = scalar_select %p174, %s175, %s176
    %p180 = pneg %p174
    %p181 = scmp.eq.s32.totalorder %s13, 1
    %p182 = por %p180, %p181
    %p183 = scmp.ne.s32.totalorder %s175, %s178
    %p184 = scmp.eq.s32.totalorder %s13, 0
    %p185 = por %p183, %p184
    %p186 = scmp.ne.s32.totalorder %s175, %s178
    %p187 = scmp.eq.s32.totalorder %s18, 1
    %p188 = por %p186, %p187
    %p189 = scmp.ne.s32.totalorder %s178, %s179
    %p190 = scmp.eq.s32.totalorder %s18, 0
    %p191 = por %p189, %p190
    %p192 = scmp.ne.s32.totalorder %s178, %s179
    %p193 = scmp.eq.s32.totalorder %s19, 1
    %p194 = por %p192, %p193
    %p196 = scmp.ne.s32.totalorder %s179, %s195
    %p197 = scmp.eq.s32.totalorder %s19, 0
    %p198 = por %p196, %p197
    %p199 = scmp.le.s32.totalorder 1, %s13
    %p200 = scmp.lt.s32.totalorder %s13, 3
    %p201 = pnand %p199, %p200
    %p202 = pneg %p201
    // Predicated region
    $region9: #{backbone_forward_pallas.1} parent=5 // pred_check
      _
    $region10: #{backbone_forward_pallas.1} parent=5 // pred_check_branch
      %204 = sbr.rel (%p201) target = $region12
    $region11: #{backbone_forward_pallas.1} parent=5 // pred_region
      %s205 = ssub.s32 %s13, 1
      // Predicated region
      $region13: #{backbone_forward_pallas.1} parent=11 // pred_check
        %p206 = pneg %p60
      $region14: #{backbone_forward_pallas.1} parent=11 // pred_check_branch
        %208 = sbr.rel (%p206) target = $region16
      $region15: #{backbone_forward_pallas.1} parent=11 // pred_region
        _
      $region16: #{backbone_forward_pallas.1} parent=11 // pred_fallthru
        _
      // Predicated region
      $region17: #{backbone_forward_pallas.1} parent=11 // pred_check
        %p209 = pneg %p81
      $region18: #{backbone_forward_pallas.1} parent=11 // pred_check_branch
        %211 = sbr.rel (%p209) target = $region20
      $region19: #{backbone_forward_pallas.1} parent=11 // pred_region
        _
      $region20: #{backbone_forward_pallas.1} parent=11 // pred_fallthru
        _
      // Predicated region
      $region21: #{backbone_forward_pallas.1} parent=11 // pred_check
        %p212 = pneg %p102
      $region22: #{backbone_forward_pallas.1} parent=11 // pred_check_branch
        %214 = sbr.rel (%p212) target = $region24
      $region23: #{backbone_forward_pallas.1} parent=11 // pred_region
        _
      $region24: #{backbone_forward_pallas.1} parent=11 // pred_fallthru
        _
      // Predicated region
      $region25: #{backbone_forward_pallas.1} parent=11 // pred_check
        %p215 = pneg %p123
      $region26: #{backbone_forward_pallas.1} parent=11 // pred_check_branch
        %217 = sbr.rel (%p215) target = $region28
      $region27: #{backbone_forward_pallas.1} parent=11 // pred_region
        _
      $region28: #{backbone_forward_pallas.1} parent=11 // pred_fallthru
        _
      // Predicated region
      $region29: #{backbone_forward_pallas.1} parent=11 // pred_check
        %p218 = pneg %p144
      $region30: #{backbone_forward_pallas.1} parent=11 // pred_check_branch
        %220 = sbr.rel (%p218) target = $region32
      $region31: #{backbone_forward_pallas.1} parent=11 // pred_region
        _
      $region32: #{backbone_forward_pallas.1} parent=11 // pred_fallthru
        _
      // Predicated region
      $region33: #{backbone_forward_pallas.1} parent=11 // pred_check
        %p221 = pneg %p165
      $region34: #{backbone_forward_pallas.1} parent=11 // pred_check_branch
        %223 = sbr.rel (%p221) target = $region36
      $region35: #{backbone_forward_pallas.1} parent=11 // pred_region
        _
      $region36: #{backbone_forward_pallas.1} parent=11 // pred_fallthru
        _
    $region12: #{backbone_forward_pallas.1} parent=5 // pred_fallthru
      _
    %p224 = scmp.lt.s32.totalorder %s13, 2
    // Predicated region
    $region37: #{backbone_forward_pallas.1} parent=5 // pred_check
      %p225 = pneg %p224
    $region38: #{backbone_forward_pallas.1} parent=5 // pred_check_branch
      %227 = sbr.rel (%p225) target = $region40
    $region39: #{backbone_forward_pallas.1} parent=5 // pred_region
      // Predicated region
      $region41: #{backbone_forward_pallas.1} parent=39 // pred_check
        %p228 = pneg %p33
      $region42: #{backbone_forward_pallas.1} parent=39 // pred_check_branch
        %230 = sbr.rel (%p228) target = $region44
      $region43: #{backbone_forward_pallas.1} parent=39 // pred_region
        %p231 = scmp.lt.s32.totalorder %s13, 1
        %s232 = scalar_select %p231, %s13, 1
        %s233 = smul.addr %s232, 60
        %s234 = smul.addr %s233, 4
        %s235 = scalar_lea.vmem %s0, %s234
      $region44: #{backbone_forward_pallas.1} parent=39 // pred_fallthru
        _
    $region40: #{backbone_forward_pallas.1} parent=5 // pred_fallthru
      _
    %p236 = scmp.le.s32.totalorder 1, %s13
    %p237 = scmp.lt.s32.totalorder %s13, 3
    %p238 = pnand %p236, %p237
    %p239 = pneg %p238
    // Predicated region
    $region45: #{backbone_forward_pallas.1} parent=5 // pred_check
      _
    $region46: #{backbone_forward_pallas.1} parent=5 // pred_check_branch
      %241 = sbr.rel (%p238) target = $region48
    $region47: #{backbone_forward_pallas.1} parent=5 // pred_region
      %s242 = ssub.s32 %s13, 1
      %p243 = scmp.lt.s32.totalorder %s18, 1
      %s244 = scalar_select %p243, %s18, 1
      %s245 = smul.addr %s244, 60
      %s246 = smul.addr %s245, 4
      %s247 = scalar_lea.vmem %s0, %s246
      %p248 = pneg %p39
      %p249 = pneg %p36
      %p250 = pneg %p60
      %p251 = pneg %p57
      %p252 = pneg %p81
      %p253 = pneg %p78
      %p254 = pneg %p102
      %p255 = pneg %p99
      %p256 = pneg %p123
      %p257 = pneg %p120
      %p258 = pneg %p144
      %p259 = pneg %p141
      %p260 = pneg %p165
      %p261 = pneg %p162
      %p262 = pneg %p191
      %p263 = pneg %p188
      %p264 = scmp.lt.s32.totalorder %s18, 1
      %s265 = scalar_select %p264, %s18, 1
      %s266 = smul.addr %s265, 2
      %s267 = scalar_lea.vmem %s7, %s266
      %p268 = scmp.lt.s32.totalorder %s18, 1
      %s269 = scalar_select %p268, %s18, 1
      %s270 = smul.addr %s269, 60
      %s271 = smul.addr %s270, 4
      %s272 = scalar_lea.vmem %s0, %s271
      %p273 = scmp.lt.s32.totalorder %s18, 1
      %s274 = scalar_select %p273, %s18, 1
      %s275 = smul.addr %s274, 2
      %s276 = scalar_lea.vmem %s7, %s275
      %v278 = vld [vmem:[%s1] sm:$0xf]
      %v279 = vld [vmem:[%s272] sm:$0xff]
      %v280 = vld [vmem:[%s272 + $0x8] sm:$0xf]
      %v281 = vld [vmem:[%s272 + $0xc] sm:$0xff]
      %v282 = vld [vmem:[%s272 + $0x14] sm:$0xf]
      %v283 = vld [vmem:[%s272 + $0x18] sm:$0xff]
      %v284 = vld [vmem:[%s272 + $0x20] sm:$0xf]
      %v285 = vld [vmem:[%s272 + $0x24] sm:$0xff]
      %v286 = vld [vmem:[%s272 + $0x2c] sm:$0xf]
      %v287 = vld [vmem:[%s272 + $0x30] sm:$0xff]
      %v288 = vld [vmem:[%s272 + $0x38] sm:$0xf]
      %v289 = vld [vmem:[%s272 + $0x3c] sm:$0xff]
      %v290 = vld [vmem:[%s272 + $0x44] sm:$0xf]
      %v291 = vld [vmem:[%s272 + $0x48] sm:$0xff]
      %v292 = vld [vmem:[%s272 + $0x50] sm:$0xf]
      %v293 = vld [vmem:[%s272 + $0x54] sm:$0xff]
      %v294 = vld [vmem:[%s272 + $0x5c] sm:$0xf]
      %v295 = vld [vmem:[%s272 + $0x60] sm:$0xff]
      %v296 = vld [vmem:[%s272 + $0x68] sm:$0xf]
      %v297 = vld [vmem:[%s272 + $0x6c] sm:$0xff]
      %v298 = vld [vmem:[%s272 + $0x74] sm:$0xf]
      %v299 = vld [vmem:[%s272 + $0x78] sm:$0xff]
      %v300 = vld [vmem:[%s272 + $0x80] sm:$0xf]
      %v301 = vld [vmem:[%s272 + $0x84] sm:$0xff]
      %v302 = vld [vmem:[%s272 + $0x8c] sm:$0xf]
      %v303 = vld [vmem:[%s272 + $0x90] sm:$0xff]
      %v304 = vld [vmem:[%s272 + $0x98] sm:$0xf]
      %v305 = vld [vmem:[%s272 + $0x9c] sm:$0xff]
      %v306 = vld [vmem:[%s272 + $0xa4] sm:$0xf]
      %v307 = vld [vmem:[%s272 + $0xa8] sm:$0xff]
      %v308 = vld [vmem:[%s272 + $0xb0] sm:$0xf]
      %v309 = vld [vmem:[%s272 + $0xb4] sm:$0xff]
      %v310 = vld [vmem:[%s272 + $0xbc] sm:$0xf]
      %v311 = vld [vmem:[%s272 + $0xc0] sm:$0xff]
      %v312 = vld [vmem:[%s272 + $0xc8] sm:$0xf]
      %v313 = vld [vmem:[%s272 + $0xcc] sm:$0xff]
      %v314 = vld [vmem:[%s272 + $0xd4] sm:$0xf]
      %v315 = vld [vmem:[%s272 + $0xd8] sm:$0xff]
      %v316 = vld [vmem:[%s272 + $0xe0] sm:$0xf]
      %v317 = vld [vmem:[%s272 + $0xe4] sm:$0xff]
      %v318 = vld [vmem:[%s272 + $0xec] sm:$0xf]
      %v319 = vld [vmem:[%s2] sm:$0xf]
      %321 = vset.pattern.permute.xlu0 0
      %322 = vperm.xlu0 %321, %v319
      %v323 = vpop.permute.xlu0 %322
      %326 = vst [vmem:[#allocation1] ss:$4 sm:$0xff] %v278
      %v327 = vld.sshfl [vmem:[#allocation1] sm:$0xff pattern:$0x73625140]
      %v328 = vld.sshfl [vmem:[#allocation1 + $0x8] sm:$0xff pattern:$0x73625140]
      %v370 = vunpack.c.l.b16 %v279
      %v371 = vunpack.c.h.b16 %v279
      %v372 = vunpack.c.l.b16 %v280
      %v373 = vunpack.c.l.b16 %v281
      %v374 = vunpack.c.h.b16 %v281
      %v375 = vunpack.c.l.b16 %v282
      %v376 = vunpack.c.l.b16 %v283
      %v377 = vunpack.c.h.b16 %v283
      %v378 = vunpack.c.l.b16 %v284
      %v379 = vunpack.c.l.b16 %v285
      %v380 = vunpack.c.h.b16 %v285
      %v381 = vunpack.c.l.b16 %v286
      %v382 = vunpack.c.l.b16 %v287
      %v383 = vunpack.c.h.b16 %v287
      %v384 = vunpack.c.l.b16 %v288
      %v385 = vunpack.c.l.b16 %v289
      %v386 = vunpack.c.h.b16 %v289
      %v387 = vunpack.c.l.b16 %v290
      %v388 = vunpack.c.l.b16 %v291
      %v389 = vunpack.c.h.b16 %v291
      %v390 = vunpack.c.l.b16 %v292
      %v391 = vunpack.c.l.b16 %v293
      %v392 = vunpack.c.h.b16 %v293
      %v393 = vunpack.c.l.b16 %v294
      %v394 = vunpack.c.l.b16 %v295
      %v395 = vunpack.c.h.b16 %v295
      %v396 = vunpack.c.l.b16 %v296
      %v397 = vunpack.c.l.b16 %v297
      %v398 = vunpack.c.h.b16 %v297
      %v399 = vunpack.c.l.b16 %v298
      %v400 = vunpack.c.l.b16 %v299
      %v401 = vunpack.c.h.b16 %v299
      %v402 = vunpack.c.l.b16 %v300
      %v403 = vunpack.c.l.b16 %v301
      %v404 = vunpack.c.h.b16 %v301
      %v405 = vunpack.c.l.b16 %v302
      %v406 = vunpack.c.l.b16 %v303
      %v407 = vunpack.c.h.b16 %v303
      %v408 = vunpack.c.l.b16 %v304
      %v409 = vunpack.c.l.b16 %v305
      %v410 = vunpack.c.h.b16 %v305
      %v411 = vunpack.c.l.b16 %v306
      %v412 = vunpack.c.l.b16 %v307
      %v413 = vunpack.c.h.b16 %v307
      %v414 = vunpack.c.l.b16 %v308
      %v415 = vunpack.c.l.b16 %v309
      %v416 = vunpack.c.h.b16 %v309
      %v417 = vunpack.c.l.b16 %v310
      %v418 = vunpack.c.l.b16 %v311
      %v419 = vunpack.c.h.b16 %v311
      %v420 = vunpack.c.l.b16 %v312
      %v421 = vunpack.c.l.b16 %v313
      %v422 = vunpack.c.h.b16 %v313
      %v423 = vunpack.c.l.b16 %v314
      %v424 = vunpack.c.l.b16 %v315
      %v425 = vunpack.c.h.b16 %v315
      %v426 = vunpack.c.l.b16 %v316
      %v427 = vunpack.c.l.b16 %v317
      %v428 = vunpack.c.h.b16 %v317
      %v429 = vunpack.c.l.b16 %v318
      %v430 = vpack.c.b16 %v373, %v370
      %v431 = vpack.c.b16 %v374, %v371
      %v432 = vpack.c.b16 %v375, %v372
      %v433 = vpack.c.b16 %v379, %v376
      %v434 = vpack.c.b16 %v380, %v377
      %v435 = vpack.c.b16 %v381, %v378
      %v436 = vpack.c.b16 %v385, %v382
      %v437 = vpack.c.b16 %v386, %v383
      %v438 = vpack.c.b16 %v387, %v384
      %v439 = vpack.c.b16 %v391, %v388
      %v440 = vpack.c.b16 %v392, %v389
      %v441 = vpack.c.b16 %v393, %v390
      %v442 = vpack.c.b16 %v397, %v394
      %v443 = vpack.c.b16 %v398, %v395
      %v444 = vpack.c.b16 %v399, %v396
      %v445 = vpack.c.b16 %v403, %v400
      %v446 = vpack.c.b16 %v404, %v401
      %v447 = vpack.c.b16 %v405, %v402
      %v448 = vpack.c.b16 %v409, %v406
      %v449 = vpack.c.b16 %v410, %v407
      %v450 = vpack.c.b16 %v411, %v408
      %v451 = vpack.c.b16 %v415, %v412
      %v452 = vpack.c.b16 %v416, %v413
      %v453 = vpack.c.b16 %v417, %v414
      %v454 = vpack.c.b16 %v421, %v418
      %v455 = vpack.c.b16 %v422, %v419
      %v456 = vpack.c.b16 %v423, %v420
      %v457 = vpack.c.b16 %v427, %v424
      %v458 = vpack.c.b16 %v428, %v425
      %v459 = vpack.c.b16 %v429, %v426
      %vm490 = vcmask 261120
      %v491 = vsel %vm490, %v328, 0
      %493 = vmatpush.bf16.msra.mxu0 %v451
      %494 = vmatpush.bf16.msra.mxu0 %v448
      %495 = vmatpush.bf16.msra.mxu0 %v445
      %496 = vmatpush.bf16.msra.mxu0 %v442
      %497 = vmatpush.bf16.msra.mxu0 %v439
      %498 = vmatpush.bf16.msra.mxu0 %v436
      %499 = vmatpush.bf16.msra.mxu0 %v433
      %500 = vmatpush.bf16.msra.mxu0 %v430
      %501 = vmatmul.bf16.gmra.mxu0 %v327
      %v502 = vpop.f32.mrf.mxu0
      %v503 = vadd.f32 %v323, %v502
      %v504 = vpop.f32.mrf.mxu0
      %505 = vdwg.mxu0
      %506 = vmatpush.bf16.msra.mxu0 0
      %507 = vmatpush.bf16.msra.mxu0 0
      %508 = vmatpush.bf16.msra.mxu0 0
      %509 = vmatpush.bf16.msra.mxu0 0
      %510 = vmatpush.bf16.msra.mxu0 0
      %511 = vmatpush.bf16.msra.mxu0 0
      %512 = vmatpush.bf16.msra.mxu0 %v457
      %513 = vmatpush.bf16.msra.mxu0 %v454
      %514 = vmatmul.bf16.gmra.mxu0 %v491
      %v515 = vpop.f32.mrf.mxu0
      %v516 = vadd.f32 %v503, %v515
      %v517 = vpop.f32.mrf.mxu0
      %518 = vdwg.mxu0
      %519 = vmatpush.bf16.msra.mxu0 %v452
      %520 = vmatpush.bf16.msra.mxu0 %v449
      %521 = vmatpush.bf16.msra.mxu0 %v446
      %522 = vmatpush.bf16.msra.mxu0 %v443
      %523 = vmatpush.bf16.msra.mxu0 %v440
      %524 = vmatpush.bf16.msra.mxu0 %v437
      %525 = vmatpush.bf16.msra.mxu0 %v434
      %526 = vmatpush.bf16.msra.mxu0 %v431
      %527 = vmatmul.bf16.gmra.mxu0 %v327
      %v528 = vpop.f32.mrf.mxu0
      %v529 = vadd.f32 %v323, %v528
      %v530 = vpop.f32.mrf.mxu0
      %531 = vdwg.mxu0
      %532 = vmatpush.bf16.msra.mxu0 0
      %533 = vmatpush.bf16.msra.mxu0 0
      %534 = vmatpush.bf16.msra.mxu0 0
      %535 = vmatpush.bf16.msra.mxu0 0
      %536 = vmatpush.bf16.msra.mxu0 0
      %537 = vmatpush.bf16.msra.mxu0 0
      %538 = vmatpush.bf16.msra.mxu0 %v458
      %539 = vmatpush.bf16.msra.mxu0 %v455
      %540 = vmatmul.bf16.gmra.mxu0 %v491
      %v541 = vpop.f32.mrf.mxu0
      %v542 = vadd.f32 %v529, %v541
      %v543 = vpop.f32.mrf.mxu0
      %544 = vdwg.mxu0
      %545 = vmatpush.bf16.msra.mxu0 %v453
      %546 = vmatpush.bf16.msra.mxu0 %v450
      %547 = vmatpush.bf16.msra.mxu0 %v447
      %548 = vmatpush.bf16.msra.mxu0 %v444
      %549 = vmatpush.bf16.msra.mxu0 %v441
      %550 = vmatpush.bf16.msra.mxu0 %v438
      %551 = vmatpush.bf16.msra.mxu0 %v435
      %552 = vmatpush.bf16.msra.mxu0 %v432
      %553 = vmatmul.bf16.gmra.mxu0 %v327
      %v554 = vpop.f32.mrf.mxu0
      %v555 = vadd.f32 %v323, %v554
      %v556 = vpop.f32.mrf.mxu0
      %557 = vdwg.mxu0
      %558 = vmatpush.bf16.msra.mxu0 0
      %559 = vmatpush.bf16.msra.mxu0 0
      %560 = vmatpush.bf16.msra.mxu0 0
      %561 = vmatpush.bf16.msra.mxu0 0
      %562 = vmatpush.bf16.msra.mxu0 0
      %563 = vmatpush.bf16.msra.mxu0 0
      %564 = vmatpush.bf16.msra.mxu0 %v459
      %565 = vmatpush.bf16.msra.mxu0 %v456
      %566 = vmatmul.bf16.gmra.mxu0 %v491
      %v567 = vpop.f32.mrf.mxu0
      %v568 = vadd.f32 %v555, %v567
      %v569 = vpop.f32.mrf.mxu0
      %570 = vdwg.mxu0
      %vm571 = vcmp.gt.f32.partialorder %v516, 0.0
      %vm572 = vcmp.gt.f32.partialorder %v542, 0.0
      %vm573 = vcmp.gt.f32.partialorder %v568, 0.0
      %v574 = vmin.f32 %v516, 0.0
      %v575 = vmin.f32 %v542, 0.0
      %v576 = vmin.f32 %v568, 0.0
      %v577 = vmul.f32 %v574, 1.442695
      %v578 = vpow.pop %v577
      %v579 = vmul.f32 %v575, 1.442695
      %v580 = vpow.pop %v579
      %v581 = vmul.f32 %v576, 1.442695
      %v582 = vpow.pop %v581
      %v583 = vsub.f32 %v578, 1.0
      %v584 = vsub.f32 %v580, 1.0
      %v585 = vsub.f32 %v582, 1.0
      %v586 = vsel %vm571, %v516, %v583
      %v587 = vsel %vm572, %v542, %v584
      %v588 = vsel %vm573, %v568, %v585
      %v589 = vld [vmem:[%s3] sm:$0xff]
      %v590 = vld [vmem:[%s3 + $0x8] sm:$0xff]
      %v591 = vld [vmem:[%s3 + $0x10] sm:$0xff]
      %v592 = vld [vmem:[%s3 + $0x18] sm:$0xff]
      %v593 = vld [vmem:[%s3 + $0x20] sm:$0xff]
      %v594 = vld [vmem:[%s3 + $0x28] sm:$0xff]
      %v595 = vld [vmem:[%s3 + $0x30] sm:$0xff]
      %v596 = vld [vmem:[%s3 + $0x38] sm:$0xff]
      %v597 = vld [vmem:[%s3 + $0x40] sm:$0xff]
      %v598 = vld [vmem:[%s3 + $0x48] sm:$0xff]
      %v599 = vld [vmem:[%s3 + $0x50] sm:$0xff]
      %v600 = vld [vmem:[%s3 + $0x58] sm:$0xff]
      %v601 = vld [vmem:[%s3 + $0x60] sm:$0xff]
      %v602 = vld [vmem:[%s3 + $0x68] sm:$0xff]
      %v603 = vld [vmem:[%s3 + $0x70] sm:$0xff]
      %v604 = vld [vmem:[%s3 + $0x78] sm:$0xff]
      %v605 = vld [vmem:[%s3 + $0x80] sm:$0xff]
      %v606 = vld [vmem:[%s3 + $0x88] sm:$0xff]
      %v607 = vld [vmem:[%s3 + $0x90] sm:$0xff]
      %v608 = vld [vmem:[%s3 + $0x98] sm:$0xff]
      %v609 = vld [vmem:[%s3 + $0xa0] sm:$0xff]
      %v610 = vld [vmem:[%s3 + $0xa8] sm:$0xff]
      %v611 = vld [vmem:[%s3 + $0xb0] sm:$0xff]
      %v612 = vld [vmem:[%s3 + $0xb8] sm:$0xff]
      %v613 = vld [vmem:[%s3 + $0xc0] sm:$0xff]
      %v614 = vld [vmem:[%s3 + $0xc8] sm:$0xff]
      %v615 = vld [vmem:[%s3 + $0xd0] sm:$0xff]
      %v616 = vld [vmem:[%s3 + $0xd8] sm:$0xff]
      %v617 = vld [vmem:[%s3 + $0xe0] sm:$0xff]
      %v618 = vld [vmem:[%s3 + $0xe8] sm:$0xff]
      %v619 = vld [vmem:[%s3 + $0xf0] sm:$0xff]
      %v620 = vld [vmem:[%s3 + $0xf8] sm:$0xff]
      %v621 = vld [vmem:[%s3 + $0x100] sm:$0xff]
      %v622 = vld [vmem:[%s3 + $0x108] sm:$0xff]
      %v623 = vld [vmem:[%s3 + $0x110] sm:$0xff]
      %v624 = vld [vmem:[%s3 + $0x118] sm:$0xff]
      %v625 = vld [vmem:[%s3 + $0x120] sm:$0xff]
      %v626 = vld [vmem:[%s3 + $0x128] sm:$0xff]
      %v627 = vld [vmem:[%s3 + $0x130] sm:$0xff]
      %v628 = vld [vmem:[%s3 + $0x138] sm:$0xff]
      %v629 = vld [vmem:[%s3 + $0x140] sm:$0xff]
      %v630 = vld [vmem:[%s3 + $0x148] sm:$0xff]
      %v631 = vld [vmem:[%s3 + $0x150] sm:$0xff]
      %v632 = vld [vmem:[%s3 + $0x158] sm:$0xff]
      %v633 = vld [vmem:[%s3 + $0x160] sm:$0xff]
      %v634 = vld [vmem:[%s3 + $0x168] sm:$0xff]
      %v635 = vld [vmem:[%s3 + $0x170] sm:$0x1f]
      %vm636 = vcmask 957440
      %v638 = vsel %vm636, %v588, 0
      %vm640 = vcmask 1044480
      %v642 = vsel %vm640, %v635, 0
      %644 = vmatpush.msra.mxu0 %v604
      %645 = vmatpush.msra.mxu0 %v603
      %646 = vmatpush.msra.mxu0 %v602
      %647 = vmatpush.msra.mxu0 %v601
      %648 = vmatpush.msra.mxu0 %v600
      %649 = vmatpush.msra.mxu0 %v599
      %650 = vmatpush.msra.mxu0 %v598
      %651 = vmatpush.msra.mxu0 %v597
      %652 = vmatpush.msra.mxu0 %v596
      %653 = vmatpush.msra.mxu0 %v595
      %654 = vmatpush.msra.mxu0 %v594
      %655 = vmatpush.msra.mxu0 %v593
      %656 = vmatpush.msra.mxu0 %v592
      %657 = vmatpush.msra.mxu0 %v591
      %658 = vmatpush.msra.mxu0 %v590
      %659 = vmatpush.msra.mxu0 %v589
      %660 = vmatmul.f32.gmra.mxu0 %v586
      %v661 = vpop.f32.mrf.mxu0
      %v662 = vadd.f32 0.0, %v661
      %663 = vdwg.mxu0
      %664 = vmatpush.msra.mxu0 %v620
      %665 = vmatpush.msra.mxu0 %v619
      %666 = vmatpush.msra.mxu0 %v618
      %667 = vmatpush.msra.mxu0 %v617
      %668 = vmatpush.msra.mxu0 %v616
      %669 = vmatpush.msra.mxu0 %v615
      %670 = vmatpush.msra.mxu0 %v614
      %671 = vmatpush.msra.mxu0 %v613
      %672 = vmatpush.msra.mxu0 %v612
      %673 = vmatpush.msra.mxu0 %v611
      %674 = vmatpush.msra.mxu0 %v610
      %675 = vmatpush.msra.mxu0 %v609
      %676 = vmatpush.msra.mxu0 %v608
      %677 = vmatpush.msra.mxu0 %v607
      %678 = vmatpush.msra.mxu0 %v606
      %679 = vmatpush.msra.mxu0 %v605
      %680 = vmatmul.f32.gmra.mxu0 %v587
      %v681 = vpop.f32.mrf.mxu0
      %v682 = vadd.f32 %v662, %v681
      %683 = vdwg.mxu0
      %684 = vmatpush.msra.mxu0 0.0
      %685 = vmatpush.msra.mxu0 %v642
      %686 = vmatpush.msra.mxu0 %v634
      %687 = vmatpush.msra.mxu0 %v633
      %688 = vmatpush.msra.mxu0 %v632
      %689 = vmatpush.msra.mxu0 %v631
      %690 = vmatpush.msra.mxu0 %v630
      %691 = vmatpush.msra.mxu0 %v629
      %692 = vmatpush.msra.mxu0 %v628
      %693 = vmatpush.msra.mxu0 %v627
      %694 = vmatpush.msra.mxu0 %v626
      %695 = vmatpush.msra.mxu0 %v625
      %696 = vmatpush.msra.mxu0 %v624
      %697 = vmatpush.msra.mxu0 %v623
      %698 = vmatpush.msra.mxu0 %v622
      %699 = vmatpush.msra.mxu0 %v621
      %700 = vmatmul.f32.gmra.mxu0 %v638
      %v701 = vpop.f32.mrf.mxu0
      %v702 = vadd.f32 %v682, %v701
      %703 = vdwg.mxu0
      %vm704 = vcmask 650240
      %705 = vst.msk [vmem:[#allocation2] sm:$0xf] %vm704, %v702
      %707 = vrot.lane.b32.xlu0 %v702, 127
      %v708 = vpop.permute.xlu0 %707
      %710 = vst.msk [vmem:[#allocation2 + $0x4] sm:$0xf] %vm704, %v708
      %711 = vrot.lane.b32.xlu0 %v702, 126
      %v712 = vpop.permute.xlu0 %711
      %714 = vst.msk [vmem:[#allocation2 + $0x8] sm:$0xf] %vm704, %v712
      %715 = vrot.lane.b32.xlu0 %v702, 125
      %v716 = vpop.permute.xlu0 %715
      %718 = vst.msk [vmem:[#allocation2 + $0xc] sm:$0xf] %vm704, %v716
      %719 = vrot.lane.b32.xlu0 %v702, 124
      %v720 = vpop.permute.xlu0 %719
      %722 = vst.msk [vmem:[#allocation2 + $0x10] sm:$0xf] %vm704, %v720
      %723 = vrot.lane.b32.xlu0 %v702, 123
      %v724 = vpop.permute.xlu0 %723
      %726 = vst.msk [vmem:[#allocation2 + $0x14] sm:$0xf] %vm704, %v724
      %727 = vrot.lane.b32.xlu0 %v702, 122
      %v728 = vpop.permute.xlu0 %727
      %730 = vst.msk [vmem:[#allocation2 + $0x18] sm:$0xf] %vm704, %v728
      %731 = vrot.lane.b32.xlu0 %v702, 121
      %v732 = vpop.permute.xlu0 %731
      %734 = vst.msk [vmem:[#allocation2 + $0x1c] sm:$0xf] %vm704, %v732
      %735 = vrot.lane.b32.xlu0 %v702, 120
      %v736 = vpop.permute.xlu0 %735
      %738 = vst.msk [vmem:[#allocation2 + $0x20] sm:$0xf] %vm704, %v736
      %739 = vrot.lane.b32.xlu0 %v702, 119
      %v740 = vpop.permute.xlu0 %739
      %742 = vst.msk [vmem:[#allocation2 + $0x24] sm:$0xf] %vm704, %v740
      %743 = vrot.lane.b32.xlu0 %v702, 118
      %v744 = vpop.permute.xlu0 %743
      %746 = vst.msk [vmem:[#allocation2 + $0x28] sm:$0xf] %vm704, %v744
      %747 = vrot.lane.b32.xlu0 %v702, 117
      %v748 = vpop.permute.xlu0 %747
      %750 = vst.msk [vmem:[#allocation2 + $0x2c] sm:$0xf] %vm704, %v748
      %751 = vrot.lane.b32.xlu0 %v702, 116
      %v752 = vpop.permute.xlu0 %751
      %754 = vst.msk [vmem:[#allocation2 + $0x30] sm:$0xf] %vm704, %v752
      %755 = vrot.lane.b32.xlu0 %v702, 115
      %v756 = vpop.permute.xlu0 %755
      %758 = vst.msk [vmem:[#allocation2 + $0x34] sm:$0xf] %vm704, %v756
      %759 = vrot.lane.b32.xlu0 %v702, 114
      %v760 = vpop.permute.xlu0 %759
      %762 = vst.msk [vmem:[#allocation2 + $0x38] sm:$0xf] %vm704, %v760
      %763 = vrot.lane.b32.xlu0 %v702, 113
      %v764 = vpop.permute.xlu0 %763
      %766 = vst.msk [vmem:[#allocation2 + $0x3c] sm:$0xf] %vm704, %v764
      %767 = vrot.lane.b32.xlu0 %v702, 112
      %v768 = vpop.permute.xlu0 %767
      %770 = vst.msk [vmem:[#allocation2 + $0x40] sm:$0xf] %vm704, %v768
      %771 = vrot.lane.b32.xlu0 %v702, 111
      %v772 = vpop.permute.xlu0 %771
      %774 = vst.msk [vmem:[#allocation2 + $0x44] sm:$0xf] %vm704, %v772
      %775 = vrot.lane.b32.xlu0 %v702, 110
      %v776 = vpop.permute.xlu0 %775
      %778 = vst.msk [vmem:[#allocation2 + $0x48] sm:$0xf] %vm704, %v776
      %779 = vrot.lane.b32.xlu0 %v702, 109
      %v780 = vpop.permute.xlu0 %779
      %782 = vst.msk [vmem:[#allocation2 + $0x4c] sm:$0xf] %vm704, %v780
      %v783 = vld [vmem:[%s4] sm:$0x3]
      %v784 = vld [vmem:[#allocation2] sm:$0xff]
      %v785 = vld [vmem:[#allocation2 + $0x8] sm:$0xff]
      %v786 = vld [vmem:[#allocation2 + $0x10] sm:$0xff]
      %v787 = vld [vmem:[#allocation2 + $0x18] sm:$0xff]
      %v788 = vld [vmem:[#allocation2 + $0x20] sm:$0xff]
      %v789 = vld [vmem:[#allocation2 + $0x28] sm:$0xff]
      %v790 = vld [vmem:[#allocation2 + $0x30] sm:$0xff]
      %v791 = vld [vmem:[#allocation2 + $0x38] sm:$0xff]
      %v792 = vld [vmem:[#allocation2 + $0x40] sm:$0xff]
      %v793 = vld [vmem:[#allocation2 + $0x48] sm:$0xff]
      %v794 = vld [vmem:[%s5] sm:$0x3]
      %796 = vset.pattern.permute.xlu0 0
      %797 = vperm.xlu0 %796, %v794
      %v798 = vpop.permute.xlu0 %797
      %vm800 = vcmask 654336
      %v802 = vsel %vm800, %v783, 0
      %804 = vmatpush.msra.mxu0 0.0
      %805 = vmatpush.msra.mxu0 0.0
      %806 = vmatpush.msra.mxu0 0.0
      %807 = vmatpush.msra.mxu0 0.0
      %808 = vmatpush.msra.mxu0 0.0
      %809 = vmatpush.msra.mxu0 0.0
      %810 = vmatpush.msra.mxu0 %v793
      %811 = vmatpush.msra.mxu0 %v792
      %812 = vmatpush.msra.mxu0 %v791
      %813 = vmatpush.msra.mxu0 %v790
      %814 = vmatpush.msra.mxu0 %v789
      %815 = vmatpush.msra.mxu0 %v788
      %816 = vmatpush.msra.mxu0 %v787
      %817 = vmatpush.msra.mxu0 %v786
      %818 = vmatpush.msra.mxu0 %v785
      %819 = vmatpush.msra.mxu0 %v784
      %820 = vmatmul.f32.gmra.mxu0 %v802
      %v821 = vpop.f32.mrf.mxu0
      %v822 = vadd.f32 %v798, %v821
      %823 = vdwg.mxu0
      %vm824 = vcmp.gt.f32.partialorder %v822, 0.0
      %v825 = vmin.f32 %v822, 0.0
      %v826 = vmul.f32 %v825, 1.442695
      %v827 = vpow.pop %v826
      %v828 = vsub.f32 %v827, 1.0
      %v829 = vsel %vm824, %v822, %v828
      %v830 = vld [vmem:[%s6] sm:$0xff]
      %v831 = vld [vmem:[%s6 + $0x8] sm:$0xff]
      %v832 = vld [vmem:[%s6 + $0x10] sm:$0xff]
      %v833 = vld [vmem:[%s6 + $0x18] sm:$0xff]
      %v834 = vld [vmem:[%s6 + $0x20] sm:$0xff]
      %v835 = vld [vmem:[%s6 + $0x28] sm:$0xff]
      %v836 = vld [vmem:[%s6 + $0x30] sm:$0xff]
      %v837 = vld [vmem:[%s6 + $0x38] sm:$0xff]
      %v838 = vld [vmem:[%s6 + $0x40] sm:$0xff]
      %v839 = vld [vmem:[%s6 + $0x48] sm:$0xff]
      %v841 = vsel %vm800, %v829, 0
      %843 = vmatpush.msra.mxu0 0.0
      %844 = vmatpush.msra.mxu0 0.0
      %845 = vmatpush.msra.mxu0 0.0
      %846 = vmatpush.msra.mxu0 0.0
      %847 = vmatpush.msra.mxu0 0.0
      %848 = vmatpush.msra.mxu0 0.0
      %849 = vmatpush.msra.mxu0 %v839
      %850 = vmatpush.msra.mxu0 %v838
      %851 = vmatpush.msra.mxu0 %v837
      %852 = vmatpush.msra.mxu0 %v836
      %853 = vmatpush.msra.mxu0 %v835
      %854 = vmatpush.msra.mxu0 %v834
      %855 = vmatpush.msra.mxu0 %v833
      %856 = vmatpush.msra.mxu0 %v832
      %857 = vmatpush.msra.mxu0 %v831
      %858 = vmatpush.msra.mxu0 %v830
      %859 = vmatmul.f32.gmra.mxu0 %v841
      %v860 = vpop.f32.mrf.mxu0
      %v861 = vadd.f32 0.0, %v860
      %862 = vdwg.mxu0
      %vm863 = vcmask 58368
      %864 = vst.msk [vmem:[%s276] sm:$0x3] %vm863, %v861
      %p865 = scmp.lt.s32.totalorder %s18, 1
      %s866 = scalar_select %p865, %s18, 1
      %s867 = smul.addr %s866, 2
      %s868 = scalar_lea.vmem %s7, %s867
      // Predicated region
      $region49: #{backbone_forward_pallas.1} parent=47 // pred_check
        %p869 = pneg %p188
      $region50: #{backbone_forward_pallas.1} parent=47 // pred_check_branch
        %871 = sbr.rel (%p869) target = $region52
      $region51: #{backbone_forward_pallas.1} parent=47 // pred_region
        _
      $region52: #{backbone_forward_pallas.1} parent=47 // pred_fallthru
        _
    $region48: #{backbone_forward_pallas.1} parent=5 // pred_fallthru
      _
    %p872 = scmp.le.s32.totalorder 2, %s13
    // Predicated region
    $region53: #{backbone_forward_pallas.1} parent=5 // pred_check
      %p873 = pneg %p872
    $region54: #{backbone_forward_pallas.1} parent=5 // pred_check_branch
      %875 = sbr.rel (%p873) target = $region56
    $region55: #{backbone_forward_pallas.1} parent=5 // pred_region
      %s876 = ssub.s32 %s13, 2
      // Predicated region
      $region57: #{backbone_forward_pallas.1} parent=55 // pred_check
        %p877 = pneg %p194
      $region58: #{backbone_forward_pallas.1} parent=55 // pred_check_branch
        %879 = sbr.rel (%p877) target = $region60
      $region59: #{backbone_forward_pallas.1} parent=55 // pred_region
        %p880 = scmp.lt.s32.totalorder %s19, 1
        %s881 = scalar_select %p880, %s19, 1
        %s882 = smul.addr %s881, 2
        %s883 = scalar_lea.vmem %s7, %s882
      $region60: #{backbone_forward_pallas.1} parent=55 // pred_fallthru
        _
    $region56: #{backbone_forward_pallas.1} parent=5 // pred_fallthru
      _
  $region6: #{backbone_forward_pallas.1} parent=0 // loop_footer
    %s17 = sadd.s32 1, %s13
  $region7: #{backbone_forward_pallas.1} parent=0 // loop_footer_branch
    %12 = sbr.rel target = $region3
  $region8: #{backbone_forward_pallas.1} parent=0 // loop_exit
    _

</llo_original>
